<compile_context>
chip_gen: v6e
topology: v6e:2x2x1
jax: 0.10.0
libtpu: 0.0.40
codegen_flags: <defaults>
</compile_context>

<pallas_src>
import functools

import jax
import jax.numpy as jnp
from jax.experimental import pallas as pl
from jax.experimental.pallas import tpu as pltpu


def _round_up(x, m):
    return (x + m - 1) // m * m


def _pick_tile(n, cands=(512, 384, 256, 128)):
    """Largest candidate tile that divides n exactly, else the full dim."""
    for c in cands:
        if n >= c and n % c == 0:
            return c
    return n


def _apply_act(y, act):
    if act == "swish":
        return y * jax.nn.sigmoid(y)
    if act == "sigmoid":
        return jax.nn.sigmoid(y)
    return y


# ----------------------------- Pallas kernels ------------------------------

def _mm_epilogue_kernel(a_ref, b_ref, s_ref, c_ref, o_ref, *, act):
    """out = act(A @ B * scale + bias); A/B tiles bf16, accumulation f32."""
    acc = jnp.dot(a_ref[...], b_ref[...], preferred_element_type=jnp.float32)
    y = _apply_act(acc * s_ref[...] + c_ref[...], act)
    o_ref[...] = y.astype(o_ref.dtype)


def matmul_fused(a, b, scale, bias, act=None, out_dtype=jnp.bfloat16):
    """(M,K)@(K,N) on the MXU with the folded-BN scale/bias (+activation) fused into
    the epilogue.  K is one full block (no K-loop / K padding copies)."""
    M, K = a.shape
    K2, N = b.shape
    assert K == K2
    a = a.astype(jnp.bfloat16)
    b = b.astype(jnp.bfloat16)
    tm = M if M <= 256 else 256
    Mp = _round_up(M, tm)
    if Mp != M:
        a = jnp.pad(a, ((0, Mp - M), (0, 0)))
    tn = _pick_tile(N)
    out = pl.pallas_call(
        functools.partial(_mm_epilogue_kernel, act=act),
        out_shape=jax.ShapeDtypeStruct((Mp, N), out_dtype),
        grid=(Mp // tm, N // tn),
        in_specs=[pl.BlockSpec((tm, K), lambda i, j: (i, 0)),
                  pl.BlockSpec((K, tn), lambda i, j: (0, j)),
                  pl.BlockSpec((1, tn), lambda i, j: (0, j)),
                  pl.BlockSpec((1, tn), lambda i, j: (0, j))],
        out_specs=pl.BlockSpec((tm, tn), lambda i, j: (i, j)),
        compiler_params=pltpu.CompilerParams(
            dimension_semantics=("parallel", "parallel")),
    )(a, b, scale.reshape(1, N).astype(jnp.float32),
      bias.reshape(1, N).astype(jnp.float32))
    return out[:M] if Mp != M else out


def _conv1x1_kernel(*refs, act, has_gate, has_res):
    """Per-batch 1x1 conv: out = act((x [* gate]) @ W * scale + bias) [+ residual]."""
    it = iter(refs)
    x_ref, w_ref, s_ref, c_ref = next(it), next(it), next(it), next(it)
    g_ref = next(it) if has_gate else None
    r_ref = next(it) if has_res else None
    o_ref = next(it)
    a = x_ref[0]                                              # (HW, K) bf16
    if has_gate:                                              # SE gate per (batch, channel)
        a = (a.astype(jnp.float32) * g_ref[0]).astype(jnp.bfloat16)
    acc = jnp.dot(a, w_ref[...], preferred_element_type=jnp.float32)
    y = _apply_act(acc * s_ref[...] + c_ref[...], act)
    if has_res:
        y = y + r_ref[0].astype(jnp.float32)
    o_ref[0] = y.astype(o_ref.dtype)


def conv1x1_fused(x, w, scale, bias, act=None, gate=None, residual=None,
                  out_dtype=jnp.bfloat16):
    """1x1 conv on NHWC, batched over B, with BN/act/SE-gate/residual fused."""
    B, H, W, K = x.shape
    N = w.shape[1]
    HW = H * W
    tn = _pick_tile(N)
    in_specs = [pl.BlockSpec((1, HW, K), lambda b, j: (b, 0, 0)),
                pl.BlockSpec((K, tn), lambda b, j: (0, j)),
                pl.BlockSpec((1, tn), lambda b, j: (0, j)),
                pl.BlockSpec((1, tn), lambda b, j: (0, j))]
    args = [x.reshape(B, HW, K).astype(jnp.bfloat16), w.astype(jnp.bfloat16),
            scale.reshape(1, N).astype(jnp.float32),
            bias.reshape(1, N).astype(jnp.float32)]
    if gate is not None:
        in_specs.append(pl.BlockSpec((1, 1, K), lambda b, j: (b, 0, 0)))
        args.append(gate.reshape(B, 1, K).astype(jnp.float32))
    if residual is not None:
        in_specs.append(pl.BlockSpec((1, HW, tn), lambda b, j: (b, 0, j)))
        args.append(residual.reshape(B, HW, N).astype(jnp.bfloat16))
    out = pl.pallas_call(
        functools.partial(_conv1x1_kernel, act=act,
                          has_gate=gate is not None, has_res=residual is not None),
        out_shape=jax.ShapeDtypeStruct((B, HW, N), out_dtype),
        grid=(B, N // tn),
        in_specs=in_specs,
        out_specs=pl.BlockSpec((1, HW, tn), lambda b, j: (b, 0, j)),
        compiler_params=pltpu.CompilerParams(
            dimension_semantics=("parallel", "parallel")),
    )(*args)
    return out.reshape(B, H, W, N)


def _dwconv_kernel(x_ref, w_ref, s_ref, c_ref, o_ref, gap_ref, *, k, stride, inv_hw):
    """Strided depthwise KxK conv + folded BN + swish; also emits the global-average
    pool of the activated output (SE input) so the tensor is never re-read for it."""
    _, Ho, Wo, C = o_ref.shape
    acc = jnp.zeros((1, Ho, Wo, C), jnp.float32)
    for kh in range(k):
        for kw in range(k):
            if stride == 1:
                win = x_ref[:, pl.ds(kh, Ho), pl.ds(kw, Wo), :]
            else:
                win = x_ref[:, pl.ds(kh, Ho, stride), pl.ds(kw, Wo, stride), :]
            tap = w_ref[kh * k + kw][None, None, None, :]
            acc = acc + win.astype(jnp.float32) * tap
    y = acc * s_ref[...] + c_ref[...]
    y = y * jax.nn.sigmoid(y)                                 # swish
    o_ref[...] = y.astype(o_ref.dtype)
    gap_ref[...] = jnp.sum(jnp.sum(y, axis=2), axis=1) * inv_hw


def depthwise_bn_swish(x, w_flat, bn, k, stride):
    """TF-SAME depthwise conv on NHWC; returns (activated output, per-channel GAP)."""
    B, H, W, C = x.shape
    Ho, Wo = -(-H // stride), -(-W // stride)
    ph = max((Ho - 1) * stride + k - H, 0)
    pw = max((Wo - 1) * stride + k - W, 0)
    xp = jnp.pad(x.astype(jnp.bfloat16),
                 ((0, 0), (ph // 2, ph - ph // 2), (pw // 2, pw - pw // 2), (0, 0)))
    Hp, Wp = H + ph, W + pw
    scale, bias = bn
    out, gap = pl.pallas_call(
        functools.partial(_dwconv_kernel, k=k, stride=stride, inv_hw=1.0 / (Ho * Wo)),
        out_shape=(jax.ShapeDtypeStruct((B, Ho, Wo, C), jnp.bfloat16),
                   jax.ShapeDtypeStruct((B, C), jnp.float32)),
        grid=(B,),
        in_specs=[pl.BlockSpec((1, Hp, Wp, C), lambda b: (b, 0, 0, 0)),
                  pl.BlockSpec((k * k, C), lambda b: (0, 0)),
                  pl.BlockSpec((1, 1, 1, C), lambda b: (0, 0, 0, 0)),
                  pl.BlockSpec((1, 1, 1, C), lambda b: (0, 0, 0, 0))],
        out_specs=(pl.BlockSpec((1, Ho, Wo, C), lambda b: (b, 0, 0, 0)),
                   pl.BlockSpec((1, C), lambda b: (b, 0))),
        compiler_params=pltpu.CompilerParams(dimension_semantics=("parallel",)),
    )(xp, w_flat.astype(jnp.float32),
      scale.reshape(1, 1, 1, C).astype(jnp.float32),
      bias.reshape(1, 1, 1, C).astype(jnp.float32))
    return out, gap


def _gap_kernel(x_ref, o_ref, *, inv_hw):
    s = jnp.sum(jnp.sum(x_ref[...].astype(jnp.float32), axis=2), axis=1)
    o_ref[...] = s * inv_hw


def global_avg_pool(x):
    B, H, W, C = x.shape
    return pl.pallas_call(
        functools.partial(_gap_kernel, inv_hw=1.0 / (H * W)),
        out_shape=jax.ShapeDtypeStruct((B, C), jnp.float32),
        grid=(B,),
        in_specs=[pl.BlockSpec((1, H, W, C), lambda b: (b, 0, 0, 0))],
        out_specs=pl.BlockSpec((1, C), lambda b: (b, 0)),
        compiler_params=pltpu.CompilerParams(dimension_semantics=("parallel",)),
    )(x)


# ------------------------- conv building blocks ------------------------------

def conv2d_same_fused(x, w_flat, bn, k, stride, act):
    """Full KxK conv (TF-SAME) via im2col (glue) + fused Pallas matmul epilogue."""
    B, H, W, Cin = x.shape
    Cout = w_flat.shape[-1]
    Ho, Wo = -(-H // stride), -(-W // stride)
    ph = max((Ho - 1) * stride + k - H, 0)
    pw = max((Wo - 1) * stride + k - W, 0)
    xp = jnp.pad(x, ((0, 0), (ph // 2, ph - ph // 2), (pw // 2, pw - pw // 2), (0, 0)))
    cols = []
    for kh in range(k):
        for kw in range(k):
            cols.append(xp[:, kh:kh + (Ho - 1) * stride + 1:stride,
                              kw:kw + (Wo - 1) * stride + 1:stride, :])
    patches = jnp.concatenate(cols, axis=-1).reshape(B * Ho * Wo, k * k * Cin)
    scale, bias = bn
    y = matmul_fused(patches, w_flat, scale, bias, act=act, out_dtype=jnp.bfloat16)
    return y.reshape(B, Ho, Wo, Cout)


# --------------------------- parameters (synthetic) --------------------------

class ParamGen:
    def __init__(self, seed=0):
        self._key = jax.random.PRNGKey(seed)
        self._n = 0

    def normal(self, shape, scale=0.05):
        self._n += 1
        k = jax.random.fold_in(self._key, self._n)
        return scale * jax.random.normal(k, shape, jnp.float32)


def make_bn(pg, C, eps=1e-3):
    # eval-mode BN folded to per-channel scale/bias
    gamma = 1.0 + pg.normal((C,))
    beta = pg.normal((C,))
    mean = pg.normal((C,))
    var = 1.0 + jnp.abs(pg.normal((C,)))
    scale = gamma / jnp.sqrt(var + eps)
    return scale, beta - mean * scale


# EfficientNet-B0 stages: (repeats, kernel, stride, expand_ratio, in_ch, out_ch)
B0_BLOCKS = [
    (1, 3, 1, 1, 32, 16),
    (2, 3, 2, 6, 16, 24),
    (2, 5, 2, 6, 24, 40),
    (3, 3, 2, 6, 40, 80),
    (3, 5, 1, 6, 80, 112),
    (4, 5, 2, 6, 112, 192),
    (1, 3, 1, 6, 192, 320),
]
SE_RATIO = 0.25


def init_frame_feats_params(out_dim, seed=0):
    pg = ParamGen(seed)
    params = {
        "stem_w": pg.normal((3 * 3 * 3, 32)).astype(jnp.bfloat16),   # pre-flattened im2col weight
        "stem_bn": make_bn(pg, 32),
        "blocks": [],
        "head_w": pg.normal((320, 1280)).astype(jnp.bfloat16),
        "head_bn": make_bn(pg, 1280),
        "fc_w": pg.normal((1280, out_dim)).astype(jnp.bfloat16),     # replaced _fc: Linear(1280, out_dim)
        "fc_b": pg.normal((out_dim,)),
    }
    for (reps, k, s, e, cin_stage, cout) in B0_BLOCKS:
        for r in range(reps):
            cin = cin_stage if r == 0 else cout
            stride = s if r == 0 else 1
            cmid = cin * e
            cse = max(1, int(cin * SE_RATIO))
            params["blocks"].append({
                "k": k, "stride": stride,
                "skip": (stride == 1 and cin == cout),
                "expand_w": pg.normal((cin, cmid)).astype(jnp.bfloat16) if e != 1 else None,
                "expand_bn": make_bn(pg, cmid) if e != 1 else None,
                "dw_w": pg.normal((k * k, cmid)),
                "dw_bn": make_bn(pg, cmid),
                "se_w1": pg.normal((cmid, cse)).astype(jnp.bfloat16),
                "se_b1": pg.normal((cse,)),
                "se_w2": pg.normal((cse, cmid)).astype(jnp.bfloat16),
                "se_b2": pg.normal((cmid,)),
                "proj_w": pg.normal((cmid, cout)).astype(jnp.bfloat16),
                "proj_bn": make_bn(pg, cout),
            })
    return params


# --------------------------------- forward ----------------------------------

def mbconv_block(x, p):
    inp = x
    if p["expand_w"] is not None:
        x = conv1x1_fused(x, p["expand_w"], *p["expand_bn"], act="swish")
    # depthwise conv + BN + swish + global-average pool in one kernel
    x, pooled = depthwise_bn_swish(x, p["dw_w"], p["dw_bn"], p["k"], p["stride"])
    # squeeze-and-excitation: two tiny fused matmuls on the in-kernel GAP result
    s = matmul_fused(pooled, p["se_w1"], jnp.ones_like(p["se_b1"]), p["se_b1"],
                     act="swish", out_dtype=jnp.float32)
    gate = matmul_fused(s, p["se_w2"], jnp.ones_like(p["se_b2"]), p["se_b2"],
                        act="sigmoid", out_dtype=jnp.float32)
    # projection conv with SE gate, folded BN, and residual add fused in one kernel
    # TODO(synk): drop_connect (stochastic depth) is identity in eval mode; omitted.
    x = conv1x1_fused(x, p["proj_w"], *p["proj_bn"], act=None,
                      gate=gate, residual=inp if p["skip"] else None)
    return x


def frame_feats_forward(params, frame_nchw):
    x = jnp.transpose(frame_nchw, (0, 2, 3, 1)).astype(jnp.bfloat16)  # NCHW -> NHWC
    x = conv2d_same_fused(x, params["stem_w"], params["stem_bn"], 3, 2, act="swish")
    for blk in params["blocks"]:
        x = mbconv_block(x, blk)
    x = conv1x1_fused(x, params["head_w"], *params["head_bn"], act="swish")
    x = global_avg_pool(x)                                            # (B, 1280) f32
    # TODO(synk): dropout(p=0.2) before the FC head is identity in eval mode; omitted.
    x = matmul_fused(x, params["fc_w"], jnp.ones_like(params["fc_b"]), params["fc_b"],
                     act=None, out_dtype=jnp.float32)
    return x


if __name__ == "__main__":
    out_dim = 32
    params = init_frame_feats_params(out_dim, seed=0)
    frame = jax.random.normal(jax.random.PRNGKey(0), (2, 3, 32, 32), jnp.float32)
    out = frame_feats_forward(params, frame)
    out = jax.block_until_ready(out)
    assert out.shape == (2, out_dim), out.shape
    assert bool(jnp.all(jnp.isfinite(out)))
    print("KERNEL_OK")
</pallas_src>

<mosaic_0001>
module attributes {stable_mosaic.version = 11 : i64} {
  func.func @_mm_epilogue_kernel(%arg0: i32, %arg1: i32, %arg2: memref<256x27xbf16, #tpu.memory_space<vmem>>, %arg3: memref<27x32xbf16, #tpu.memory_space<vmem>>, %arg4: memref<1x32xf32, #tpu.memory_space<vmem>>, %arg5: memref<1x32xf32, #tpu.memory_space<vmem>>, %arg6: memref<256x32xbf16, #tpu.memory_space<vmem>>) attributes {dimension_semantics = [#tpu.dimension_semantics<parallel>, #tpu.dimension_semantics<parallel>], iteration_bounds = array<i64: 2, 1>, scalar_prefetch = 0 : i64, scratch_operands = 0 : i64, tpu.core_type = #tpu.core_type<tc>, window_params = [{transform_indices = @transform_0, window_bounds = array<i64: 256, 27>}, {transform_indices = @transform_1, window_bounds = array<i64: 27, 32>}, {transform_indices = @transform_2, window_bounds = array<i64: 1, 32>}, {transform_indices = @transform_3, window_bounds = array<i64: 1, 32>}, {transform_indices = @transform_4, window_bounds = array<i64: 256, 32>}]} {
    %c0 = arith.constant 0 : index
    %c0_0 = arith.constant 0 : index
    %0 = vector.load %arg2[%c0, %c0_0] : memref<256x27xbf16, #tpu.memory_space<vmem>>, vector<256x27xbf16>
    %c0_1 = arith.constant 0 : index
    %c0_2 = arith.constant 0 : index
    %1 = vector.load %arg3[%c0_1, %c0_2] : memref<27x32xbf16, #tpu.memory_space<vmem>>, vector<27x32xbf16>
    %cst = arith.constant dense<0.000000e+00> : vector<256x32xf32>
    %2 = tpu.matmul %0, %1, %cst {dimension_numbers = #tpu.dot_dimension_numbers<[1], [0], [0], [1], [0, 0, 1, 1], [], []>} : vector<256x27xbf16>, vector<27x32xbf16>, vector<256x32xf32> -> vector<256x32xf32>
    %c0_3 = arith.constant 0 : index
    %c0_4 = arith.constant 0 : index
    %3 = vector.load %arg4[%c0_3, %c0_4] : memref<1x32xf32, #tpu.memory_space<vmem>>, vector<1x32xf32>
    %4 = vector.broadcast %3 : vector<1x32xf32> to vector<256x32xf32>
    %5 = arith.mulf %2, %4 : vector<256x32xf32>
    %c0_5 = arith.constant 0 : index
    %c0_6 = arith.constant 0 : index
    %6 = vector.load %arg5[%c0_5, %c0_6] : memref<1x32xf32, #tpu.memory_space<vmem>>, vector<1x32xf32>
    %7 = vector.broadcast %6 : vector<1x32xf32> to vector<256x32xf32>
    %8 = arith.addf %5, %7 : vector<256x32xf32>
    %9 = arith.negf %8 : vector<256x32xf32>
    %10 = math.exp %9 : vector<256x32xf32>
    %cst_7 = arith.constant 1.000000e+00 : f32
    %11 = vector.broadcast %cst_7 : f32 to vector<256x32xf32>
    %12 = arith.addf %11, %10 : vector<256x32xf32>
    %13 = arith.divf %11, %12 : vector<256x32xf32>
    %14 = arith.mulf %8, %13 : vector<256x32xf32>
    %15 = arith.truncf %14 : vector<256x32xf32> to vector<256x32xbf16>
    %c0_8 = arith.constant 0 : index
    %c0_9 = arith.constant 0 : index
    %16 = vector.load %arg6[%c0_8, %c0_9] : memref<256x32xbf16, #tpu.memory_space<vmem>>, vector<256x32xbf16>
    tpu.vector_store %arg6[%c0_8, %c0_9], %15 {strides = array<i32>} : memref<256x32xbf16, #tpu.memory_space<vmem>>, vector<256x32xbf16>,
    return
  }
  func.func @transform_0(%arg0: i32, %arg1: i32) -> (i32, i32) {
    %c0_i32 = arith.constant 0 : i32
    %c0_i32_0 = arith.constant 0 : i32
    return %arg0, %c0_i32 : i32, i32
  }
  func.func @transform_1(%arg0: i32, %arg1: i32) -> (i32, i32) {
    %c0_i32 = arith.constant 0 : i32
    %c0_i32_0 = arith.constant 0 : i32
    return %c0_i32, %arg1 : i32, i32
  }
  func.func @transform_2(%arg0: i32, %arg1: i32) -> (i32, i32) {
    %c0_i32 = arith.constant 0 : i32
    %c0_i32_0 = arith.constant 0 : i32
    return %c0_i32, %arg1 : i32, i32
  }
  func.func @transform_3(%arg0: i32, %arg1: i32) -> (i32, i32) {
    %c0_i32 = arith.constant 0 : i32
    %c0_i32_0 = arith.constant 0 : i32
    return %c0_i32, %arg1 : i32, i32
  }
  func.func @transform_4(%arg0: i32, %arg1: i32) -> (i32, i32) {
    %c0_i32 = arith.constant 0 : i32
    return %arg0, %arg1 : i32, i32
  }
}

</mosaic_0001>

<llo_original>
// kernel: tpu_custom_call.1
$region0: #{tpu_custom_call.1}
  #allocation0 [shape = 'u32[]', space=smem, size = 0x4, offset = 0x4, fixed_abs, tag = 'smem constant byte address 0x4 - core index']
  #allocation1 [shape = 'u32[144,128]{1,0:T(1,128)}', space=vmem, size = 0x12000, scoped, tag = 'internal scratch']
  %s0 = inlined_call_operand.vmem [shape: bf16[512,27], index: 0, kind: input, shape index: {}]
  %s1 = inlined_call_operand.vmem [shape: bf16[27,32], index: 1, kind: input, shape index: {}]
  %s2 = inlined_call_operand.vmem [shape: f32[1,32], index: 2, kind: input, shape index: {}]
  %s3 = inlined_call_operand.vmem [shape: f32[1,32], index: 3, kind: input, shape index: {}]
  %s4 = inlined_call_operand.vmem [shape: bf16[512,32], index: 4, kind: output, shape index: {}]
  %s5 = sld [smem:[#allocation0]]
  $region49: #{tpu_custom_call.1} parent=0
    _
  %s7 = ssub.s32 1, %s5
  %s8 = scalar_select 0, %s7, %s5
  loop: start=0, step=1, limit=4
  $region2: #{tpu_custom_call.1} parent=0 // loop_pre_header
    _
  $region3: #{tpu_custom_call.1} parent=0 // loop_header
    %s10 = sphi 0, %s14
    %p11 = scmp.ge.s32.totalorder %s10, 4
    %s17 = sphi 0, %s29
    %s18 = sphi 0, %s25
    %s19 = sphi 0, %s17
    %s20 = sphi 0, %s18
    %s21 = sphi 0, %s19
    %s22 = sphi 0, %s20
    %s32 = sphi 0, %s34
    %s35 = sphi 0, %s32
    %s36 = sphi 0, %s35
    %s52 = sphi 0, %s36
    %s58 = sphi 0, %s60
    %s61 = sphi 0, %s58
    %s62 = sphi 0, %s61
    %s78 = sphi 0, %s62
    %s84 = sphi 0, %s86
    %s87 = sphi 0, %s84
    %s88 = sphi 0, %s87
    %s104 = sphi 0, %s88
    %s110 = sphi 0, %s112
    %s113 = sphi 0, %s110
    %s114 = sphi 0, %s113
    %s130 = sphi 0, %s114
    %s138 = sphi 0, %s140
    %s141 = sphi 0, %s138
    %s142 = sphi 0, %s141
    %s158 = sphi 0, %s142
  $region4: #{tpu_custom_call.1} parent=0 // loop_header_branch
    %13 = sbr.rel (%p11) target = $region8
  $region5: #{tpu_custom_call.1} parent=0 // loop_body
    %s15 = ssub.s32 %s10, 1
    %s16 = ssub.s32 %s10, 2
    %s23 = sadd.s32 1, %s18
    %p24 = scmp.ge.s32.totalorder %s23, 1
    %s25 = scalar_select %p24, 0, %s23
    %s26 = sadd.s32 1, %s17
    %s27 = scalar_select %p24, %s26, %s17
    %p28 = scmp.ge.s32.totalorder %s27, 2
    %s29 = scalar_select %p28, 0, %s27
    %s30 = ssub.s32 %s17, %s29
    %p31 = scmp.eq.s32.totalorder %s30, 0
    %s33 = sadd.s32 %s32, 1
    %s34 = scalar_select %p31, %s32, %s33
    %p37 = pneg %p31
    %p38 = scmp.eq.s32.totalorder %s10, 1
    %p39 = por %p37, %p38
    %p40 = scmp.ne.s32.totalorder %s32, %s35
    %p41 = scmp.eq.s32.totalorder %s10, 0
    %p42 = por %p40, %p41
    %p43 = scmp.ne.s32.totalorder %s32, %s35
    %p44 = scmp.eq.s32.totalorder %s15, 1
    %p45 = por %p43, %p44
    %p46 = scmp.ne.s32.totalorder %s35, %s36
    %p47 = scmp.eq.s32.totalorder %s15, 0
    %p48 = por %p46, %p47
    %p49 = scmp.ne.s32.totalorder %s35, %s36
    %p50 = scmp.eq.s32.totalorder %s16, 1
    %p51 = por %p49, %p50
    %p53 = scmp.ne.s32.totalorder %s36, %s52
    %p54 = scmp.eq.s32.totalorder %s16, 0
    %p55 = por %p53, %p54
    %s56 = ssub.s32 %s18, %s25
    %p57 = scmp.eq.s32.totalorder %s56, 0
    %s59 = sadd.s32 %s58, 1
    %s60 = scalar_select %p57, %s58, %s59
    %p63 = pneg %p57
    %p64 = scmp.eq.s32.totalorder %s10, 1
    %p65 = por %p63, %p64
    %p66 = scmp.ne.s32.totalorder %s58, %s61
    %p67 = scmp.eq.s32.totalorder %s10, 0
    %p68 = por %p66, %p67
    %p69 = scmp.ne.s32.totalorder %s58, %s61
    %p70 = scmp.eq.s32.totalorder %s15, 1
    %p71 = por %p69, %p70
    %p72 = scmp.ne.s32.totalorder %s61, %s62
    %p73 = scmp.eq.s32.totalorder %s15, 0
    %p74 = por %p72, %p73
    %p75 = scmp.ne.s32.totalorder %s61, %s62
    %p76 = scmp.eq.s32.totalorder %s16, 1
    %p77 = por %p75, %p76
    %p79 = scmp.ne.s32.totalorder %s62, %s78
    %p80 = scmp.eq.s32.totalorder %s16, 0
    %p81 = por %p79, %p80
    %s82 = ssub.s32 %s18, %s25
    %p83 = scmp.eq.s32.totalorder %s82, 0
    %s85 = sadd.s32 %s84, 1
    %s86 = scalar_select %p83, %s84, %s85
    %p89 = pneg %p83
    %p90 = scmp.eq.s32.totalorder %s10, 1
    %p91 = por %p89, %p90
    %p92 = scmp.ne.s32.totalorder %s84, %s87
    %p93 = scmp.eq.s32.totalorder %s10, 0
    %p94 = por %p92, %p93
    %p95 = scmp.ne.s32.totalorder %s84, %s87
    %p96 = scmp.eq.s32.totalorder %s15, 1
    %p97 = por %p95, %p96
    %p98 = scmp.ne.s32.totalorder %s87, %s88
    %p99 = scmp.eq.s32.totalorder %s15, 0
    %p100 = por %p98, %p99
    %p101 = scmp.ne.s32.totalorder %s87, %s88
    %p102 = scmp.eq.s32.totalorder %s16, 1
    %p103 = por %p101, %p102
    %p105 = scmp.ne.s32.totalorder %s88, %s104
    %p106 = scmp.eq.s32.totalorder %s16, 0
    %p107 = por %p105, %p106
    %s108 = ssub.s32 %s18, %s25
    %p109 = scmp.eq.s32.totalorder %s108, 0
    %s111 = sadd.s32 %s110, 1
    %s112 = scalar_select %p109, %s110, %s111
    %p115 = pneg %p109
    %p116 = scmp.eq.s32.totalorder %s10, 1
    %p117 = por %p115, %p116
    %p118 = scmp.ne.s32.totalorder %s110, %s113
    %p119 = scmp.eq.s32.totalorder %s10, 0
    %p120 = por %p118, %p119
    %p121 = scmp.ne.s32.totalorder %s110, %s113
    %p122 = scmp.eq.s32.totalorder %s15, 1
    %p123 = por %p121, %p122
    %p124 = scmp.ne.s32.totalorder %s113, %s114
    %p125 = scmp.eq.s32.totalorder %s15, 0
    %p126 = por %p124, %p125
    %p127 = scmp.ne.s32.totalorder %s113, %s114
    %p128 = scmp.eq.s32.totalorder %s16, 1
    %p129 = por %p127, %p128
    %p131 = scmp.ne.s32.totalorder %s114, %s130
    %p132 = scmp.eq.s32.totalorder %s16, 0
    %p133 = por %p131, %p132
    %s134 = ssub.s32 %s17, %s29
    %s135 = ssub.s32 %s18, %s25
    %s136 = sor.u32 %s134, %s135
    %p137 = scmp.eq.s32.totalorder %s136, 0
    %s139 = sadd.s32 %s138, 1
    %s140 = scalar_select %p137, %s138, %s139
    %p143 = pneg %p137
    %p144 = scmp.eq.s32.totalorder %s10, 1
    %p145 = por %p143, %p144
    %p146 = scmp.ne.s32.totalorder %s138, %s141
    %p147 = scmp.eq.s32.totalorder %s10, 0
    %p148 = por %p146, %p147
    %p149 = scmp.ne.s32.totalorder %s138, %s141
    %p150 = scmp.eq.s32.totalorder %s15, 1
    %p151 = por %p149, %p150
    %p152 = scmp.ne.s32.totalorder %s141, %s142
    %p153 = scmp.eq.s32.totalorder %s15, 0
    %p154 = por %p152, %p153
    %p155 = scmp.ne.s32.totalorder %s141, %s142
    %p156 = scmp.eq.s32.totalorder %s16, 1
    %p157 = por %p155, %p156
    %p159 = scmp.ne.s32.totalorder %s142, %s158
    %p160 = scmp.eq.s32.totalorder %s16, 0
    %p161 = por %p159, %p160
    %p162 = scmp.le.s32.totalorder 1, %s10
    %p163 = scmp.lt.s32.totalorder %s10, 3
    %p164 = pnand %p162, %p163
    %p165 = pneg %p164
    // Predicated region
    $region9: #{tpu_custom_call.1} parent=5 // pred_check
      _
    $region10: #{tpu_custom_call.1} parent=5 // pred_check_branch
      %167 = sbr.rel (%p164) target = $region12
    $region11: #{tpu_custom_call.1} parent=5 // pred_region
      %s168 = ssub.s32 %s10, 1
      // Predicated region
      $region13: #{tpu_custom_call.1} parent=11 // pred_check
        %p169 = pneg %p74
      $region14: #{tpu_custom_call.1} parent=11 // pred_check_branch
        %171 = sbr.rel (%p169) target = $region16
      $region15: #{tpu_custom_call.1} parent=11 // pred_region
        %p172 = scmp.lt.s32.totalorder %s20, 0
        %s173 = scalar_select %p172, %s20, 0
        %s174 = smul.addr %s173, 4
        %s175 = scalar_lea.vmem %s1, %s174
      $region16: #{tpu_custom_call.1} parent=11 // pred_fallthru
        _
      // Predicated region
      $region17: #{tpu_custom_call.1} parent=11 // pred_check
        %p176 = pneg %p100
      $region18: #{tpu_custom_call.1} parent=11 // pred_check_branch
        %178 = sbr.rel (%p176) target = $region20
      $region19: #{tpu_custom_call.1} parent=11 // pred_region
        %p179 = scmp.lt.s32.totalorder %s20, 0
        %s180 = scalar_select %p179, %s20, 0
        %s181 = scalar_lea.vmem %s2, %s180
      $region20: #{tpu_custom_call.1} parent=11 // pred_fallthru
        _
      // Predicated region
      $region21: #{tpu_custom_call.1} parent=11 // pred_check
        %p182 = pneg %p126
      $region22: #{tpu_custom_call.1} parent=11 // pred_check_branch
        %184 = sbr.rel (%p182) target = $region24
      $region23: #{tpu_custom_call.1} parent=11 // pred_region
        %p185 = scmp.lt.s32.totalorder %s20, 0
        %s186 = scalar_select %p185, %s20, 0
        %s187 = scalar_lea.vmem %s3, %s186
      $region24: #{tpu_custom_call.1} parent=11 // pred_fallthru
        _
    $region12: #{tpu_custom_call.1} parent=5 // pred_fallthru
      _
    %p188 = scmp.lt.s32.totalorder %s10, 2
    // Predicated region
    $region25: #{tpu_custom_call.1} parent=5 // pred_check
      %p189 = pneg %p188
    $region26: #{tpu_custom_call.1} parent=5 // pred_check_branch
      %191 = sbr.rel (%p189) target = $region28
    $region27: #{tpu_custom_call.1} parent=5 // pred_region
      // Predicated region
      $region29: #{tpu_custom_call.1} parent=27 // pred_check
        %p192 = pneg %p42
      $region30: #{tpu_custom_call.1} parent=27 // pred_check_branch
        %194 = sbr.rel (%p192) target = $region32
      $region31: #{tpu_custom_call.1} parent=27 // pred_region
        %s195 = smul.u32 32, %s17
        %p196 = scmp.lt.s32.totalorder %s195, 63
        %s197 = scalar_select %p196, %s195, 63
        %s198 = smul.addr %s197, 4
        %s199 = scalar_lea.vmem %s0, %s198
        %s200 = smul.u32 32, %s17
      $region32: #{tpu_custom_call.1} parent=27 // pred_fallthru
        _
    $region28: #{tpu_custom_call.1} parent=5 // pred_fallthru
      _
    %p201 = scmp.le.s32.totalorder 1, %s10
    %p202 = scmp.lt.s32.totalorder %s10, 3
    %p203 = pnand %p201, %p202
    %p204 = pneg %p203
    // Predicated region
    $region33: #{tpu_custom_call.1} parent=5 // pred_check
      _
    $region34: #{tpu_custom_call.1} parent=5 // pred_check_branch
      %206 = sbr.rel (%p203) target = $region36
    $region35: #{tpu_custom_call.1} parent=5 // pred_region
      %s207 = ssub.s32 %s10, 1
      %s208 = smul.u32 32, %s19
      %p209 = scmp.lt.s32.totalorder %s208, 63
      %s210 = scalar_select %p209, %s208, 63
      %s211 = smul.addr %s210, 4
      %s212 = scalar_lea.vmem %s0, %s211
      %p213 = pneg %p48
      %p214 = pneg %p45
      %p215 = scmp.lt.s32.totalorder %s20, 0
      %s216 = scalar_select %p215, %s20, 0
      %s217 = smul.addr %s216, 4
      %s218 = scalar_lea.vmem %s1, %s217
      %p219 = pneg %p74
      %p220 = pneg %p71
      %p221 = scmp.lt.s32.totalorder %s20, 0
      %s222 = scalar_select %p221, %s20, 0
      %s223 = scalar_lea.vmem %s2, %s222
      %p224 = pneg %p100
      %p225 = pneg %p97
      %p226 = scmp.lt.s32.totalorder %s20, 0
      %s227 = scalar_select %p226, %s20, 0
      %s228 = scalar_lea.vmem %s3, %s227
      %p229 = pneg %p126
      %p230 = pneg %p123
      %p231 = pneg %p154
      %p232 = pneg %p151
      %s233 = smul.u32 32, %s19
      %p234 = scmp.lt.s32.totalorder %s233, 63
      %s235 = scalar_select %p234, %s233, 63
      %p236 = scmp.lt.s32.totalorder %s20, 0
      %s237 = scalar_select %p236, %s20, 0
      %s238 = sadd.s32 %s237, %s235
      %s239 = smul.addr %s238, 4
      %s240 = scalar_lea.vmem %s4, %s239
      %s241 = smul.u32 32, %s19
      %p242 = scmp.lt.s32.totalorder %s241, 63
      %s243 = scalar_select %p242, %s241, 63
      %s244 = smul.addr %s243, 4
      %s245 = scalar_lea.vmem %s0, %s244
      %s246 = smul.u32 32, %s19
      %p247 = scmp.lt.s32.totalorder %s20, 0
      %s248 = scalar_select %p247, %s20, 0
      %s249 = smul.addr %s248, 4
      %s250 = scalar_lea.vmem %s1, %s249
      %p251 = scmp.lt.s32.totalorder %s20, 0
      %s252 = scalar_select %p251, %s20, 0
      %s253 = scalar_lea.vmem %s2, %s252
      %p254 = scmp.lt.s32.totalorder %s20, 0
      %s255 = scalar_select %p254, %s20, 0
      %s256 = scalar_lea.vmem %s3, %s255
      %s257 = smul.u32 32, %s19
      %p258 = scmp.lt.s32.totalorder %s257, 63
      %s259 = scalar_select %p258, %s257, 63
      %p260 = scmp.lt.s32.totalorder %s20, 0
      %s261 = scalar_select %p260, %s20, 0
      %s262 = sadd.s32 %s261, %s259
      %s263 = smul.addr %s262, 4
      %s264 = scalar_lea.vmem %s4, %s263
      %s265 = smul.u32 32, %s19
      %v267 = vld [vmem:[%s245] sm:$0xf]
      %v268 = vld [vmem:[%s245 + $0x4] sm:$0xf]
      %v269 = vld [vmem:[%s245 + $0x8] sm:$0xf]
      %v270 = vld [vmem:[%s245 + $0xc] sm:$0xf]
      %v271 = vld [vmem:[%s245 + $0x10] sm:$0xf]
      %v272 = vld [vmem:[%s245 + $0x14] sm:$0xf]
      %v273 = vld [vmem:[%s245 + $0x18] sm:$0xf]
      %v274 = vld [vmem:[%s245 + $0x1c] sm:$0xf]
      %v275 = vld [vmem:[%s245 + $0x20] sm:$0xf]
      %v276 = vld [vmem:[%s245 + $0x24] sm:$0xf]
      %v277 = vld [vmem:[%s245 + $0x28] sm:$0xf]
      %v278 = vld [vmem:[%s245 + $0x2c] sm:$0xf]
      %v279 = vld [vmem:[%s245 + $0x30] sm:$0xf]
      %v280 = vld [vmem:[%s245 + $0x34] sm:$0xf]
      %v281 = vld [vmem:[%s245 + $0x38] sm:$0xf]
      %v282 = vld [vmem:[%s245 + $0x3c] sm:$0xf]
      %v283 = vld [vmem:[%s245 + $0x40] sm:$0xf]
      %v284 = vld [vmem:[%s245 + $0x44] sm:$0xf]
      %v285 = vld [vmem:[%s245 + $0x48] sm:$0xf]
      %v286 = vld [vmem:[%s245 + $0x4c] sm:$0xf]
      %v287 = vld [vmem:[%s245 + $0x50] sm:$0xf]
      %v288 = vld [vmem:[%s245 + $0x54] sm:$0xf]
      %v289 = vld [vmem:[%s245 + $0x58] sm:$0xf]
      %v290 = vld [vmem:[%s245 + $0x5c] sm:$0xf]
      %v291 = vld [vmem:[%s245 + $0x60] sm:$0xf]
      %v292 = vld [vmem:[%s245 + $0x64] sm:$0xf]
      %v293 = vld [vmem:[%s245 + $0x68] sm:$0xf]
      %v294 = vld [vmem:[%s245 + $0x6c] sm:$0xf]
      %v295 = vld [vmem:[%s245 + $0x70] sm:$0xf]
      %v296 = vld [vmem:[%s245 + $0x74] sm:$0xf]
      %v297 = vld [vmem:[%s245 + $0x78] sm:$0xf]
      %v298 = vld [vmem:[%s245 + $0x7c] sm:$0xf]
      %v299 = vld [vmem:[%s250] sm:$0xf]
      %v300 = vld [vmem:[%s250 + $0x4] sm:$0xf]
      %v301 = vld [vmem:[%s250 + $0x8] sm:$0xf]
      %v302 = vld [vmem:[%s250 + $0xc] sm:$0x3]
      %v335 = vunpack.c.l.b16 %v267
      %v336 = vunpack.c.l.b16 %v268
      %v337 = vunpack.c.l.b16 %v269
      %v338 = vunpack.c.l.b16 %v270
      %v339 = vunpack.c.l.b16 %v271
      %v340 = vunpack.c.l.b16 %v272
      %v341 = vunpack.c.l.b16 %v273
      %v342 = vunpack.c.l.b16 %v274
      %v343 = vunpack.c.l.b16 %v275
      %v344 = vunpack.c.l.b16 %v276
      %v345 = vunpack.c.l.b16 %v277
      %v346 = vunpack.c.l.b16 %v278
      %v347 = vunpack.c.l.b16 %v279
      %v348 = vunpack.c.l.b16 %v280
      %v349 = vunpack.c.l.b16 %v281
      %v350 = vunpack.c.l.b16 %v282
      %v351 = vunpack.c.l.b16 %v283
      %v352 = vunpack.c.l.b16 %v284
      %v353 = vunpack.c.l.b16 %v285
      %v354 = vunpack.c.l.b16 %v286
      %v355 = vunpack.c.l.b16 %v287
      %v356 = vunpack.c.l.b16 %v288
      %v357 = vunpack.c.l.b16 %v289
      %v358 = vunpack.c.l.b16 %v290
      %v359 = vunpack.c.l.b16 %v291
      %v360 = vunpack.c.l.b16 %v292
      %v361 = vunpack.c.l.b16 %v293
      %v362 = vunpack.c.l.b16 %v294
      %v363 = vunpack.c.l.b16 %v295
      %v364 = vunpack.c.l.b16 %v296
      %v365 = vunpack.c.l.b16 %v297
      %v366 = vunpack.c.l.b16 %v298
      %v367 = vpack.c.b16 %v336, %v335
      %v368 = vpack.c.b16 %v338, %v337
      %v369 = vpack.c.b16 %v340, %v339
      %v370 = vpack.c.b16 %v342, %v341
      %v371 = vpack.c.b16 %v344, %v343
      %v372 = vpack.c.b16 %v346, %v345
      %v373 = vpack.c.b16 %v348, %v347
      %v374 = vpack.c.b16 %v350, %v349
      %v375 = vpack.c.b16 %v352, %v351
      %v376 = vpack.c.b16 %v354, %v353
      %v377 = vpack.c.b16 %v356, %v355
      %v378 = vpack.c.b16 %v358, %v357
      %v379 = vpack.c.b16 %v360, %v359
      %v380 = vpack.c.b16 %v362, %v361
      %v381 = vpack.c.b16 %v364, %v363
      %v382 = vpack.c.b16 %v366, %v365
      %v387 = vunpack.c.l.b16 %v299
      %v388 = vunpack.c.l.b16 %v300
      %v389 = vunpack.c.l.b16 %v301
      %v390 = vunpack.c.l.b16 %v302
      %v391 = vpack.c.b16 %v388, %v387
      %v392 = vpack.c.b16 %v390, %v389
      %vm394 = vcmask 220160
      %v396 = vsel %vm394, %v367, 0
      %v399 = vsel %vm394, %v368, 0
      %v402 = vsel %vm394, %v369, 0
      %v405 = vsel %vm394, %v370, 0
      %v408 = vsel %vm394, %v371, 0
      %v411 = vsel %vm394, %v372, 0
      %v414 = vsel %vm394, %v373, 0
      %v417 = vsel %vm394, %v374, 0
      %v420 = vsel %vm394, %v375, 0
      %v423 = vsel %vm394, %v376, 0
      %v426 = vsel %vm394, %v377, 0
      %v429 = vsel %vm394, %v378, 0
      %v432 = vsel %vm394, %v379, 0
      %v435 = vsel %vm394, %v380, 0
      %v438 = vsel %vm394, %v381, 0
      %v441 = vsel %vm394, %v382, 0
      %vm443 = vcmask 1044480
      %vm444 = vcmask 1045504
      %v445 = vsel %vm443, 4294967295, 65535
      %v446 = vsel %vm444, %v445, 0
      %v448 = vand.u32 %v392, %v446
      %450 = vmatprep.subr.bf16.mxu0 0
      %451 = vmatpush1.bf16.msra.mxu0 0
      %452 = vmatprep.subr.bf16.mxu0 0
      %453 = vmatpush1.bf16.msra.mxu0 0
      %454 = vmatprep.subr.bf16.mxu0 0
      %455 = vmatpush1.bf16.msra.mxu0 0
      %456 = vmatprep.subr.bf16.mxu0 0
      %457 = vmatpush1.bf16.msra.mxu0 0
      %458 = vmatprep.subr.bf16.mxu0 0
      %459 = vmatpush1.bf16.msra.mxu0 0
      %460 = vmatprep.subr.bf16.mxu0 0
      %461 = vmatpush1.bf16.msra.mxu0 0
      %462 = vmatprep.subr.bf16.mxu0 0
      %463 = vmatpush1.bf16.msra.mxu0 %v448
      %464 = vmatprep.subr.bf16.mxu0 0
      %465 = vmatpush1.bf16.msra.mxu0 %v391
      %466 = vmatprep.subr.bf16.mxu0 0
      %467 = vmatpush2.bf16.msra.mxu0 0
      %468 = vmatprep.subr.bf16.mxu0 0
      %469 = vmatpush2.bf16.msra.mxu0 0
      %470 = vmatprep.subr.bf16.mxu0 0
      %471 = vmatpush2.bf16.msra.mxu0 0
      %472 = vmatprep.subr.bf16.mxu0 0
      %473 = vmatpush2.bf16.msra.mxu0 0
      %474 = vmatprep.subr.bf16.mxu0 0
      %475 = vmatpush2.bf16.msra.mxu0 0
      %476 = vmatprep.subr.bf16.mxu0 0
      %477 = vmatpush2.bf16.msra.mxu0 0
      %478 = vmatprep.subr.bf16.mxu0 0
      %479 = vmatpush2.bf16.msra.mxu0 0
      %480 = vmatprep.subr.bf16.mxu0 0
      %481 = vmatpush2.bf16.msra.mxu0 0
      %482 = vmatprep.mubr.bf16.mxu0 0
      %483 = vmatmul.mubr.bf16.gmra.mxu0 %v396
      %v484 = vpop.f32.mrf.mxu0
      %v485 = vadd.f32 0.0, %v484
      %v486 = vpop.f32.mrf.mxu0
      %v487 = vpop.f32.mrf.mxu0
      %v488 = vadd.f32 0.0, %v487
      %v489 = vpop.f32.mrf.mxu0
      %490 = vmatprep.mubr.bf16.mxu0 0
      %491 = vmatmul.mubr.bf16.gmra.mxu0 %v399
      %v492 = vpop.f32.mrf.mxu0
      %v493 = vadd.f32 0.0, %v492
      %v494 = vpop.f32.mrf.mxu0
      %v495 = vpop.f32.mrf.mxu0
      %v496 = vadd.f32 0.0, %v495
      %v497 = vpop.f32.mrf.mxu0
      %498 = vmatprep.mubr.bf16.mxu0 0
      %499 = vmatmul.mubr.bf16.gmra.mxu0 %v402
      %v500 = vpop.f32.mrf.mxu0
      %v501 = vadd.f32 0.0, %v500
      %v502 = vpop.f32.mrf.mxu0
      %v503 = vpop.f32.mrf.mxu0
      %v504 = vadd.f32 0.0, %v503
      %v505 = vpop.f32.mrf.mxu0
      %506 = vmatprep.mubr.bf16.mxu0 0
      %507 = vmatmul.mubr.bf16.gmra.mxu0 %v405
      %v508 = vpop.f32.mrf.mxu0
      %v509 = vadd.f32 0.0, %v508
      %v510 = vpop.f32.mrf.mxu0
      %v511 = vpop.f32.mrf.mxu0
      %v512 = vadd.f32 0.0, %v511
      %v513 = vpop.f32.mrf.mxu0
      %514 = vmatprep.mubr.bf16.mxu0 0
      %515 = vmatmul.mubr.bf16.gmra.mxu0 %v408
      %v516 = vpop.f32.mrf.mxu0
      %v517 = vadd.f32 0.0, %v516
      %v518 = vpop.f32.mrf.mxu0
      %v519 = vpop.f32.mrf.mxu0
      %v520 = vadd.f32 0.0, %v519
      %v521 = vpop.f32.mrf.mxu0
      %522 = vmatprep.mubr.bf16.mxu0 0
      %523 = vmatmul.mubr.bf16.gmra.mxu0 %v411
      %v524 = vpop.f32.mrf.mxu0
      %v525 = vadd.f32 0.0, %v524
      %v526 = vpop.f32.mrf.mxu0
      %v527 = vpop.f32.mrf.mxu0
      %v528 = vadd.f32 0.0, %v527
      %v529 = vpop.f32.mrf.mxu0
      %530 = vmatprep.mubr.bf16.mxu0 0
      %531 = vmatmul.mubr.bf16.gmra.mxu0 %v414
      %v532 = vpop.f32.mrf.mxu0
      %v533 = vadd.f32 0.0, %v532
      %v534 = vpop.f32.mrf.mxu0
      %v535 = vpop.f32.mrf.mxu0
      %v536 = vadd.f32 0.0, %v535
      %v537 = vpop.f32.mrf.mxu0
      %538 = vmatprep.mubr.bf16.mxu0 0
      %539 = vmatmul.mubr.bf16.gmra.mxu0 %v417
      %v540 = vpop.f32.mrf.mxu0
      %v541 = vadd.f32 0.0, %v540
      %v542 = vpop.f32.mrf.mxu0
      %v543 = vpop.f32.mrf.mxu0
      %v544 = vadd.f32 0.0, %v543
      %v545 = vpop.f32.mrf.mxu0
      %546 = vmatprep.mubr.bf16.mxu0 0
      %547 = vmatmul.mubr.bf16.gmra.mxu0 %v420
      %v548 = vpop.f32.mrf.mxu0
      %v549 = vadd.f32 0.0, %v548
      %v550 = vpop.f32.mrf.mxu0
      %v551 = vpop.f32.mrf.mxu0
      %v552 = vadd.f32 0.0, %v551
      %v553 = vpop.f32.mrf.mxu0
      %554 = vmatprep.mubr.bf16.mxu0 0
      %555 = vmatmul.mubr.bf16.gmra.mxu0 %v423
      %v556 = vpop.f32.mrf.mxu0
      %v557 = vadd.f32 0.0, %v556
      %v558 = vpop.f32.mrf.mxu0
      %v559 = vpop.f32.mrf.mxu0
      %v560 = vadd.f32 0.0, %v559
      %v561 = vpop.f32.mrf.mxu0
      %562 = vmatprep.mubr.bf16.mxu0 0
      %563 = vmatmul.mubr.bf16.gmra.mxu0 %v426
      %v564 = vpop.f32.mrf.mxu0
      %v565 = vadd.f32 0.0, %v564
      %v566 = vpop.f32.mrf.mxu0
      %v567 = vpop.f32.mrf.mxu0
      %v568 = vadd.f32 0.0, %v567
      %v569 = vpop.f32.mrf.mxu0
      %570 = vmatprep.mubr.bf16.mxu0 0
      %571 = vmatmul.mubr.bf16.gmra.mxu0 %v429
      %v572 = vpop.f32.mrf.mxu0
      %v573 = vadd.f32 0.0, %v572
      %v574 = vpop.f32.mrf.mxu0
      %v575 = vpop.f32.mrf.mxu0
      %v576 = vadd.f32 0.0, %v575
      %v577 = vpop.f32.mrf.mxu0
      %578 = vmatprep.mubr.bf16.mxu0 0
      %579 = vmatmul.mubr.bf16.gmra.mxu0 %v432
      %v580 = vpop.f32.mrf.mxu0
      %v581 = vadd.f32 0.0, %v580
      %v582 = vpop.f32.mrf.mxu0
      %v583 = vpop.f32.mrf.mxu0
      %v584 = vadd.f32 0.0, %v583
      %v585 = vpop.f32.mrf.mxu0
      %586 = vmatprep.mubr.bf16.mxu0 0
      %587 = vmatmul.mubr.bf16.gmra.mxu0 %v435
      %v588 = vpop.f32.mrf.mxu0
      %v589 = vadd.f32 0.0, %v588
      %v590 = vpop.f32.mrf.mxu0
      %v591 = vpop.f32.mrf.mxu0
      %v592 = vadd.f32 0.0, %v591
      %v593 = vpop.f32.mrf.mxu0
      %594 = vmatprep.mubr.bf16.mxu0 0
      %595 = vmatmul.mubr.bf16.gmra.mxu0 %v438
      %v596 = vpop.f32.mrf.mxu0
      %v597 = vadd.f32 0.0, %v596
      %v598 = vpop.f32.mrf.mxu0
      %v599 = vpop.f32.mrf.mxu0
      %v600 = vadd.f32 0.0, %v599
      %v601 = vpop.f32.mrf.mxu0
      %602 = vmatprep.mubr.bf16.mxu0 0
      %603 = vmatmul.mubr.bf16.gmra.mxu0 %v441
      %v604 = vpop.f32.mrf.mxu0
      %v605 = vadd.f32 0.0, %v604
      %v606 = vpop.f32.mrf.mxu0
      %v607 = vpop.f32.mrf.mxu0
      %v608 = vadd.f32 0.0, %v607
      %v609 = vpop.f32.mrf.mxu0
      %610 = vdwg.mxu0
      %v611 = vld [vmem:[%s253] sm:$0x1]
      %v613 = vlaneseq
      %v614 = vshrl.u32 %v613, 7
      %v615 = vsub.s32 0, %v614
      %v616 = vrot.slane %v611, %v615
      %v618 = vmul.f32 %v485, %v616
      %v619 = vmul.f32 %v488, %v616
      %v620 = vmul.f32 %v493, %v616
      %v621 = vmul.f32 %v496, %v616
      %v622 = vmul.f32 %v501, %v616
      %v623 = vmul.f32 %v504, %v616
      %v624 = vmul.f32 %v509, %v616
      %v625 = vmul.f32 %v512, %v616
      %v626 = vmul.f32 %v517, %v616
      %v627 = vmul.f32 %v520, %v616
      %v628 = vmul.f32 %v525, %v616
      %v629 = vmul.f32 %v528, %v616
      %v630 = vmul.f32 %v533, %v616
      %v631 = vmul.f32 %v536, %v616
      %v632 = vmul.f32 %v541, %v616
      %v633 = vmul.f32 %v544, %v616
      %v634 = vmul.f32 %v549, %v616
      %v635 = vmul.f32 %v552, %v616
      %v636 = vmul.f32 %v557, %v616
      %v637 = vmul.f32 %v560, %v616
      %v638 = vmul.f32 %v565, %v616
      %v639 = vmul.f32 %v568, %v616
      %v640 = vmul.f32 %v573, %v616
      %v641 = vmul.f32 %v576, %v616
      %v642 = vmul.f32 %v581, %v616
      %v643 = vmul.f32 %v584, %v616
      %v644 = vmul.f32 %v589, %v616
      %v645 = vmul.f32 %v592, %v616
      %v646 = vmul.f32 %v597, %v616
      %v647 = vmul.f32 %v600, %v616
      %v648 = vmul.f32 %v605, %v616
      %v649 = vmul.f32 %v608, %v616
      %v650 = vld [vmem:[%s256] sm:$0x1]
      %v652 = vlaneseq
      %v653 = vshrl.u32 %v652, 7
      %v654 = vsub.s32 0, %v653
      %v655 = vrot.slane %v650, %v654
      %v657 = vadd.f32 %v618, %v655
      %v658 = vadd.f32 %v619, %v655
      %v659 = vadd.f32 %v620, %v655
      %v660 = vadd.f32 %v621, %v655
      %v661 = vadd.f32 %v622, %v655
      %v662 = vadd.f32 %v623, %v655
      %v663 = vadd.f32 %v624, %v655
      %v664 = vadd.f32 %v625, %v655
      %v665 = vadd.f32 %v626, %v655
      %v666 = vadd.f32 %v627, %v655
      %v667 = vadd.f32 %v628, %v655
      %v668 = vadd.f32 %v629, %v655
      %v669 = vadd.f32 %v630, %v655
      %v670 = vadd.f32 %v631, %v655
      %v671 = vadd.f32 %v632, %v655
      %v672 = vadd.f32 %v633, %v655
      %v673 = vadd.f32 %v634, %v655
      %v674 = vadd.f32 %v635, %v655
      %v675 = vadd.f32 %v636, %v655
      %v676 = vadd.f32 %v637, %v655
      %v677 = vadd.f32 %v638, %v655
      %v678 = vadd.f32 %v639, %v655
      %v679 = vadd.f32 %v640, %v655
      %v680 = vadd.f32 %v641, %v655
      %v681 = vadd.f32 %v642, %v655
      %v682 = vadd.f32 %v643, %v655
      %v683 = vadd.f32 %v644, %v655
      %v684 = vadd.f32 %v645, %v655
      %v685 = vadd.f32 %v646, %v655
      %v686 = vadd.f32 %v647, %v655
      %v687 = vadd.f32 %v648, %v655
      %v688 = vadd.f32 %v649, %v655
      %v689 = vxor.u32 %v657, 2147483648
      %v690 = vxor.u32 %v658, 2147483648
      %v691 = vxor.u32 %v659, 2147483648
      %v692 = vxor.u32 %v660, 2147483648
      %v693 = vxor.u32 %v661, 2147483648
      %v694 = vxor.u32 %v662, 2147483648
      %v695 = vxor.u32 %v663, 2147483648
      %v696 = vxor.u32 %v664, 2147483648
      %v697 = vxor.u32 %v665, 2147483648
      %v698 = vxor.u32 %v666, 2147483648
      %v699 = vxor.u32 %v667, 2147483648
      %v700 = vxor.u32 %v668, 2147483648
      %v701 = vxor.u32 %v669, 2147483648
      %v702 = vxor.u32 %v670, 2147483648
      %v703 = vxor.u32 %v671, 2147483648
      %v704 = vxor.u32 %v672, 2147483648
      %v705 = vxor.u32 %v673, 2147483648
      %v706 = vxor.u32 %v674, 2147483648
      %v707 = vxor.u32 %v675, 2147483648
      %v708 = vxor.u32 %v676, 2147483648
      %v709 = vxor.u32 %v677, 2147483648
      %v710 = vxor.u32 %v678, 2147483648
      %v711 = vxor.u32 %v679, 2147483648
      %v712 = vxor.u32 %v680, 2147483648
      %v713 = vxor.u32 %v681, 2147483648
      %v714 = vxor.u32 %v682, 2147483648
      %v715 = vxor.u32 %v683, 2147483648
      %v716 = vxor.u32 %v684, 2147483648
      %v717 = vxor.u32 %v685, 2147483648
      %v718 = vxor.u32 %v686, 2147483648
      %v719 = vxor.u32 %v687, 2147483648
      %v720 = vxor.u32 %v688, 2147483648
      %v721 = vmul.f32 %v689, 1.442695
      %v722 = vpow.pop %v721
      %v723 = vmul.f32 %v690, 1.442695
      %v724 = vpow.pop %v723
      %v725 = vmul.f32 %v691, 1.442695
      %v726 = vpow.pop %v725
      %v727 = vmul.f32 %v692, 1.442695
      %v728 = vpow.pop %v727
      %v729 = vmul.f32 %v693, 1.442695
      %v730 = vpow.pop %v729
      %v731 = vmul.f32 %v694, 1.442695
      %v732 = vpow.pop %v731
      %v733 = vmul.f32 %v695, 1.442695
      %v734 = vpow.pop %v733
      %v735 = vmul.f32 %v696, 1.442695
      %v736 = vpow.pop %v735
      %v737 = vmul.f32 %v697, 1.442695
      %v738 = vpow.pop %v737
      %v739 = vmul.f32 %v698, 1.442695
      %v740 = vpow.pop %v739
      %v741 = vmul.f32 %v699, 1.442695
      %v742 = vpow.pop %v741
      %v743 = vmul.f32 %v700, 1.442695
      %v744 = vpow.pop %v743
      %v745 = vmul.f32 %v701, 1.442695
      %v746 = vpow.pop %v745
      %v747 = vmul.f32 %v702, 1.442695
      %v748 = vpow.pop %v747
      %v749 = vmul.f32 %v703, 1.442695
      %v750 = vpow.pop %v749
      %v751 = vmul.f32 %v704, 1.442695
      %v752 = vpow.pop %v751
      %v753 = vmul.f32 %v705, 1.442695
      %v754 = vpow.pop %v753
      %v755 = vmul.f32 %v706, 1.442695
      %v756 = vpow.pop %v755
      %v757 = vmul.f32 %v707, 1.442695
      %v758 = vpow.pop %v757
      %v759 = vmul.f32 %v708, 1.442695
      %v760 = vpow.pop %v759
      %v761 = vmul.f32 %v709, 1.442695
      %v762 = vpow.pop %v761
      %v763 = vmul.f32 %v710, 1.442695
      %v764 = vpow.pop %v763
      %v765 = vmul.f32 %v711, 1.442695
      %v766 = vpow.pop %v765
      %v767 = vmul.f32 %v712, 1.442695
      %v768 = vpow.pop %v767
      %v769 = vmul.f32 %v713, 1.442695
      %v770 = vpow.pop %v769
      %v771 = vmul.f32 %v714, 1.442695
      %v772 = vpow.pop %v771
      %v773 = vmul.f32 %v715, 1.442695
      %v774 = vpow.pop %v773
      %v775 = vmul.f32 %v716, 1.442695
      %v776 = vpow.pop %v775
      %v777 = vmul.f32 %v717, 1.442695
      %v778 = vpow.pop %v777
      %v779 = vmul.f32 %v718, 1.442695
      %v780 = vpow.pop %v779
      %v781 = vmul.f32 %v719, 1.442695
      %v782 = vpow.pop %v781
      %v783 = vmul.f32 %v720, 1.442695
      %v784 = vpow.pop %v783
      %v785 = vadd.f32 %v722, 1.0
      %v786 = vadd.f32 %v724, 1.0
      %v787 = vadd.f32 %v726, 1.0
      %v788 = vadd.f32 %v728, 1.0
      %v789 = vadd.f32 %v730, 1.0
      %v790 = vadd.f32 %v732, 1.0
      %v791 = vadd.f32 %v734, 1.0
      %v792 = vadd.f32 %v736, 1.0
      %v793 = vadd.f32 %v738, 1.0
      %v794 = vadd.f32 %v740, 1.0
      %v795 = vadd.f32 %v742, 1.0
      %v796 = vadd.f32 %v744, 1.0
      %v797 = vadd.f32 %v746, 1.0
      %v798 = vadd.f32 %v748, 1.0
      %v799 = vadd.f32 %v750, 1.0
      %v800 = vadd.f32 %v752, 1.0
      %v801 = vadd.f32 %v754, 1.0
      %v802 = vadd.f32 %v756, 1.0
      %v803 = vadd.f32 %v758, 1.0
      %v804 = vadd.f32 %v760, 1.0
      %v805 = vadd.f32 %v762, 1.0
      %v806 = vadd.f32 %v764, 1.0
      %v807 = vadd.f32 %v766, 1.0
      %v808 = vadd.f32 %v768, 1.0
      %v809 = vadd.f32 %v770, 1.0
      %v810 = vadd.f32 %v772, 1.0
      %v811 = vadd.f32 %v774, 1.0
      %v812 = vadd.f32 %v776, 1.0
      %v813 = vadd.f32 %v778, 1.0
      %v814 = vadd.f32 %v780, 1.0
      %v815 = vadd.f32 %v782, 1.0
      %v816 = vadd.f32 %v784, 1.0
      %v817 = vrcp.pop %v785
      %v818 = vmul.f32 1.0, %v817
      %v819 = vrcp.pop %v786
      %v820 = vmul.f32 1.0, %v819
      %v821 = vrcp.pop %v787
      %v822 = vmul.f32 1.0, %v821
      %v823 = vrcp.pop %v788
      %v824 = vmul.f32 1.0, %v823
      %v825 = vrcp.pop %v789
      %v826 = vmul.f32 1.0, %v825
      %v827 = vrcp.pop %v790
      %v828 = vmul.f32 1.0, %v827
      %v829 = vrcp.pop %v791
      %v830 = vmul.f32 1.0, %v829
      %v831 = vrcp.pop %v792
      %v832 = vmul.f32 1.0, %v831
      %v833 = vrcp.pop %v793
      %v834 = vmul.f32 1.0, %v833
      %v835 = vrcp.pop %v794
      %v836 = vmul.f32 1.0, %v835
      %v837 = vrcp.pop %v795
      %v838 = vmul.f32 1.0, %v837
      %v839 = vrcp.pop %v796
      %v840 = vmul.f32 1.0, %v839
      %v841 = vrcp.pop %v797
      %v842 = vmul.f32 1.0, %v841
      %v843 = vrcp.pop %v798
      %v844 = vmul.f32 1.0, %v843
      %v845 = vrcp.pop %v799
      %v846 = vmul.f32 1.0, %v845
      %v847 = vrcp.pop %v800
      %v848 = vmul.f32 1.0, %v847
      %v849 = vrcp.pop %v801
      %v850 = vmul.f32 1.0, %v849
      %v851 = vrcp.pop %v802
      %v852 = vmul.f32 1.0, %v851
      %v853 = vrcp.pop %v803
      %v854 = vmul.f32 1.0, %v853
      %v855 = vrcp.pop %v804
      %v856 = vmul.f32 1.0, %v855
      %v857 = vrcp.pop %v805
      %v858 = vmul.f32 1.0, %v857
      %v859 = vrcp.pop %v806
      %v860 = vmul.f32 1.0, %v859
      %v861 = vrcp.pop %v807
      %v862 = vmul.f32 1.0, %v861
      %v863 = vrcp.pop %v808
      %v864 = vmul.f32 1.0, %v863
      %v865 = vrcp.pop %v809
      %v866 = vmul.f32 1.0, %v865
      %v867 = vrcp.pop %v810
      %v868 = vmul.f32 1.0, %v867
      %v869 = vrcp.pop %v811
      %v870 = vmul.f32 1.0, %v869
      %v871 = vrcp.pop %v812
      %v872 = vmul.f32 1.0, %v871
      %v873 = vrcp.pop %v813
      %v874 = vmul.f32 1.0, %v873
      %v875 = vrcp.pop %v814
      %v876 = vmul.f32 1.0, %v875
      %v877 = vrcp.pop %v815
      %v878 = vmul.f32 1.0, %v877
      %v879 = vrcp.pop %v816
      %v880 = vmul.f32 1.0, %v879
      %v881 = vmul.f32 %v657, %v818
      %v882 = vmul.f32 %v658, %v820
      %v883 = vmul.f32 %v659, %v822
      %v884 = vmul.f32 %v660, %v824
      %v885 = vmul.f32 %v661, %v826
      %v886 = vmul.f32 %v662, %v828
      %v887 = vmul.f32 %v663, %v830
      %v888 = vmul.f32 %v664, %v832
      %v889 = vmul.f32 %v665, %v834
      %v890 = vmul.f32 %v666, %v836
      %v891 = vmul.f32 %v667, %v838
      %v892 = vmul.f32 %v668, %v840
      %v893 = vmul.f32 %v669, %v842
      %v894 = vmul.f32 %v670, %v844
      %v895 = vmul.f32 %v671, %v846
      %v896 = vmul.f32 %v672, %v848
      %v897 = vmul.f32 %v673, %v850
      %v898 = vmul.f32 %v674, %v852
      %v899 = vmul.f32 %v675, %v854
      %v900 = vmul.f32 %v676, %v856
      %v901 = vmul.f32 %v677, %v858
      %v902 = vmul.f32 %v678, %v860
      %v903 = vmul.f32 %v679, %v862
      %v904 = vmul.f32 %v680, %v864
      %v905 = vmul.f32 %v681, %v866
      %v906 = vmul.f32 %v682, %v868
      %v907 = vmul.f32 %v683, %v870
      %v908 = vmul.f32 %v684, %v872
      %v909 = vmul.f32 %v685, %v874
      %v910 = vmul.f32 %v686, %v876
      %v911 = vmul.f32 %v687, %v878
      %v912 = vmul.f32 %v688, %v880
      %v913 = vpack.c.bf16 %v882, %v881
      %v914 = vpack.c.bf16 %v884, %v883
      %v915 = vpack.c.bf16 %v886, %v885
      %v916 = vpack.c.bf16 %v888, %v887
      %v917 = vpack.c.bf16 %v890, %v889
      %v918 = vpack.c.bf16 %v892, %v891
      %v919 = vpack.c.bf16 %v894, %v893
      %v920 = vpack.c.bf16 %v896, %v895
      %v921 = vpack.c.bf16 %v898, %v897
      %v922 = vpack.c.bf16 %v900, %v899
      %v923 = vpack.c.bf16 %v902, %v901
      %v924 = vpack.c.bf16 %v904, %v903
      %v925 = vpack.c.bf16 %v906, %v905
      %v926 = vpack.c.bf16 %v908, %v907
      %v927 = vpack.c.bf16 %v910, %v909
      %v928 = vpack.c.bf16 %v912, %v911
      %v945 = vunpack.c.l.b16 %v913
      %v946 = vunpack.c.h.b16 %v913
      %v947 = vunpack.c.l.b16 %v914
      %v948 = vunpack.c.h.b16 %v914
      %v949 = vunpack.c.l.b16 %v915
      %v950 = vunpack.c.h.b16 %v915
      %v951 = vunpack.c.l.b16 %v916
      %v952 = vunpack.c.h.b16 %v916
      %v953 = vunpack.c.l.b16 %v917
      %v954 = vunpack.c.h.b16 %v917
      %v955 = vunpack.c.l.b16 %v918
      %v956 = vunpack.c.h.b16 %v918
      %v957 = vunpack.c.l.b16 %v919
      %v958 = vunpack.c.h.b16 %v919
      %v959 = vunpack.c.l.b16 %v920
      %v960 = vunpack.c.h.b16 %v920
      %v961 = vunpack.c.l.b16 %v921
      %v962 = vunpack.c.h.b16 %v921
      %v963 = vunpack.c.l.b16 %v922
      %v964 = vunpack.c.h.b16 %v922
      %v965 = vunpack.c.l.b16 %v923
      %v966 = vunpack.c.h.b16 %v923
      %v967 = vunpack.c.l.b16 %v924
      %v968 = vunpack.c.h.b16 %v924
      %v969 = vunpack.c.l.b16 %v925
      %v970 = vunpack.c.h.b16 %v925
      %v971 = vunpack.c.l.b16 %v926
      %v972 = vunpack.c.h.b16 %v926
      %v973 = vunpack.c.l.b16 %v927
      %v974 = vunpack.c.h.b16 %v927
      %v975 = vunpack.c.l.b16 %v928
      %v976 = vunpack.c.h.b16 %v928
      %v977 = vpack.c.b16 %v945, %v945
      %v978 = vpack.c.b16 %v946, %v946
      %v979 = vpack.c.b16 %v947, %v947
      %v980 = vpack.c.b16 %v948, %v948
      %v981 = vpack.c.b16 %v949, %v949
      %v982 = vpack.c.b16 %v950, %v950
      %v983 = vpack.c.b16 %v951, %v951
      %v984 = vpack.c.b16 %v952, %v952
      %v985 = vpack.c.b16 %v953, %v953
      %v986 = vpack.c.b16 %v954, %v954
      %v987 = vpack.c.b16 %v955, %v955
      %v988 = vpack.c.b16 %v956, %v956
      %v989 = vpack.c.b16 %v957, %v957
      %v990 = vpack.c.b16 %v958, %v958
      %v991 = vpack.c.b16 %v959, %v959
      %v992 = vpack.c.b16 %v960, %v960
      %v993 = vpack.c.b16 %v961, %v961
      %v994 = vpack.c.b16 %v962, %v962
      %v995 = vpack.c.b16 %v963, %v963
      %v996 = vpack.c.b16 %v964, %v964
      %v997 = vpack.c.b16 %v965, %v965
      %v998 = vpack.c.b16 %v966, %v966
      %v999 = vpack.c.b16 %v967, %v967
      %v1000 = vpack.c.b16 %v968, %v968
      %v1001 = vpack.c.b16 %v969, %v969
      %v1002 = vpack.c.b16 %v970, %v970
      %v1003 = vpack.c.b16 %v971, %v971
      %v1004 = vpack.c.b16 %v972, %v972
      %v1005 = vpack.c.b16 %v973, %v973
      %v1006 = vpack.c.b16 %v974, %v974
      %v1007 = vpack.c.b16 %v975, %v975
      %v1008 = vpack.c.b16 %v976, %v976
      %vm1041 = vcmask 257024
      %1042 = vst.msk [vmem:[%s264] sm:$0xf] %vm1041, %v977
      %1043 = vst.msk [vmem:[%s264 + $0x4] sm:$0xf] %vm1041, %v978
      %1044 = vst.msk [vmem:[%s264 + $0x8] sm:$0xf] %vm1041, %v979
      %1045 = vst.msk [vmem:[%s264 + $0xc] sm:$0xf] %vm1041, %v980
      %1046 = vst.msk [vmem:[%s264 + $0x10] sm:$0xf] %vm1041, %v981
      %1047 = vst.msk [vmem:[%s264 + $0x14] sm:$0xf] %vm1041, %v982
      %1048 = vst.msk [vmem:[%s264 + $0x18] sm:$0xf] %vm1041, %v983
      %1049 = vst.msk [vmem:[%s264 + $0x1c] sm:$0xf] %vm1041, %v984
      %1050 = vst.msk [vmem:[%s264 + $0x20] sm:$0xf] %vm1041, %v985
      %1051 = vst.msk [vmem:[%s264 + $0x24] sm:$0xf] %vm1041, %v986
      %1052 = vst.msk [vmem:[%s264 + $0x28] sm:$0xf] %vm1041, %v987
      %1053 = vst.msk [vmem:[%s264 + $0x2c] sm:$0xf] %vm1041, %v988
      %1054 = vst.msk [vmem:[%s264 + $0x30] sm:$0xf] %vm1041, %v989
      %1055 = vst.msk [vmem:[%s264 + $0x34] sm:$0xf] %vm1041, %v990
      %1056 = vst.msk [vmem:[%s264 + $0x38] sm:$0xf] %vm1041, %v991
      %1057 = vst.msk [vmem:[%s264 + $0x3c] sm:$0xf] %vm1041, %v992
      %1058 = vst.msk [vmem:[%s264 + $0x40] sm:$0xf] %vm1041, %v993
      %1059 = vst.msk [vmem:[%s264 + $0x44] sm:$0xf] %vm1041, %v994
      %1060 = vst.msk [vmem:[%s264 + $0x48] sm:$0xf] %vm1041, %v995
      %1061 = vst.msk [vmem:[%s264 + $0x4c] sm:$0xf] %vm1041, %v996
      %1062 = vst.msk [vmem:[%s264 + $0x50] sm:$0xf] %vm1041, %v997
      %1063 = vst.msk [vmem:[%s264 + $0x54] sm:$0xf] %vm1041, %v998
      %1064 = vst.msk [vmem:[%s264 + $0x58] sm:$0xf] %vm1041, %v999
      %1065 = vst.msk [vmem:[%s264 + $0x5c] sm:$0xf] %vm1041, %v1000
      %1066 = vst.msk [vmem:[%s264 + $0x60] sm:$0xf] %vm1041, %v1001
      %1067 = vst.msk [vmem:[%s264 + $0x64] sm:$0xf] %vm1041, %v1002
      %1068 = vst.msk [vmem:[%s264 + $0x68] sm:$0xf] %vm1041, %v1003
      %1069 = vst.msk [vmem:[%s264 + $0x6c] sm:$0xf] %vm1041, %v1004
      %1070 = vst.msk [vmem:[%s264 + $0x70] sm:$0xf] %vm1041, %v1005
      %1071 = vst.msk [vmem:[%s264 + $0x74] sm:$0xf] %vm1041, %v1006
      %1072 = vst.msk [vmem:[%s264 + $0x78] sm:$0xf] %vm1041, %v1007
      %1073 = vst.msk [vmem:[%s264 + $0x7c] sm:$0xf] %vm1041, %v1008
      %s1074 = smul.u32 32, %s19
      %p1075 = scmp.lt.s32.totalorder %s1074, 63
      %s1076 = scalar_select %p1075, %s1074, 63
      %p1077 = scmp.lt.s32.totalorder %s20, 0
      %s1078 = scalar_select %p1077, %s20, 0
      %s1079 = sadd.s32 %s1078, %s1076
      %s1080 = smul.addr %s1079, 4
      %s1081 = scalar_lea.vmem %s4, %s1080
      // Predicated region
      $region37: #{tpu_custom_call.1} parent=35 // pred_check
        %p1082 = pneg %p151
      $region38: #{tpu_custom_call.1} parent=35 // pred_check_branch
        %1084 = sbr.rel (%p1082) target = $region40
      $region39: #{tpu_custom_call.1} parent=35 // pred_region
        %s1085 = smul.u32 32, %s19
      $region40: #{tpu_custom_call.1} parent=35 // pred_fallthru
        _
    $region36: #{tpu_custom_call.1} parent=5 // pred_fallthru
      _
    %p1086 = scmp.le.s32.totalorder 2, %s10
    // Predicated region
    $region41: #{tpu_custom_call.1} parent=5 // pred_check
      %p1087 = pneg %p1086
    $region42: #{tpu_custom_call.1} parent=5 // pred_check_branch
      %1089 = sbr.rel (%p1087) target = $region44
    $region43: #{tpu_custom_call.1} parent=5 // pred_region
      %s1090 = ssub.s32 %s10, 2
      // Predicated region
      $region45: #{tpu_custom_call.1} parent=43 // pred_check
        %p1091 = pneg %p157
      $region46: #{tpu_custom_call.1} parent=43 // pred_check_branch
        %1093 = sbr.rel (%p1091) target = $region48
      $region47: #{tpu_custom_call.1} parent=43 // pred_region
        %s1094 = smul.u32 32, %s21
        %p1095 = scmp.lt.s32.totalorder %s1094, 63
        %s1096 = scalar_select %p1095, %s1094, 63
        %p1097 = scmp.lt.s32.totalorder %s22, 0
        %s1098 = scalar_select %p1097, %s22, 0
        %s1099 = sadd.s32 %s1098, %s1096
        %s1100 = smul.addr %s1099, 4
        %s1101 = scalar_lea.vmem %s4, %s1100
      $region48: #{tpu_custom_call.1} parent=43 // pred_fallthru
        _
    $region44: #{tpu_custom_call.1} parent=5 // pred_fallthru
      _
  $region6: #{tpu_custom_call.1} parent=0 // loop_footer
    %s14 = sadd.s32 1, %s10
  $region7: #{tpu_custom_call.1} parent=0 // loop_footer_branch
    %9 = sbr.rel target = $region3
  $region8: #{tpu_custom_call.1} parent=0 // loop_exit
    _

</llo_original>
